<compile_context>
chip_gen: v6e
topology: v6e:2x2x1
jax: 0.10.0
libtpu: 0.0.40
codegen_flags: <defaults>
</compile_context>

<pallas_src>
import math

import jax
import jax.numpy as jnp
from jax import lax
from jax.experimental import pallas as pl
from jax.experimental.pallas import tpu as pltpu


def _round_up(n, m):
    return ((n + m - 1) // m) * m


def _cdiv(a, b):
    return (a + b - 1) // b


def _pad2d(a, rows, cols):
    r, c = a.shape
    if r == rows and c == cols:
        return a
    return jnp.pad(a, ((0, rows - r), (0, cols - c)))


def _gelu_erf(x):
    # PyTorch nn.GELU() default (erf-based, NOT the tanh approximation).
    return 0.5 * x * (1.0 + lax.erf(x * (1.0 / math.sqrt(2.0))))


def _gelu_tanh(x):
    # Optional cheaper approximation (EUP tanh) for small n_embd on v6e/v7x.
    c = math.sqrt(2.0 / math.pi)
    return 0.5 * x * (1.0 + jnp.tanh(c * (x + 0.044715 * (x * x * x))))


def _chip_defaults():
    """Per-generation (tm, n_core_splits, vmem_limit_bytes)."""
    kind = ""
    try:
        kind = jax.devices()[0].device_kind.lower()
    except Exception:
        pass
    try:
        cap = int(getattr(pltpu.get_tpu_info(), "vmem_capacity_bytes"))
    except Exception:
        cap = None

    if "v6" in kind:                        # v6e: 1 TC, 128 MiB VMEM, 256-wide MXU
        tm, splits, default_cap = 512, 1, 128 * 1024 * 1024
    elif "lite" in kind or "v5e" in kind:   # v5e: 1 TC, 128 MiB VMEM, 128-wide MXU
        tm, splits, default_cap = 128, 1, 128 * 1024 * 1024
    elif "7" in kind:                       # v7x: 2 TCs/chip, 64 MiB VMEM per TC
        tm, splits, default_cap = 256, 2, 64 * 1024 * 1024
    elif "v4" in kind or "v5" in kind:      # v4 / v5p megacore chips
        tm, splits, default_cap = 256, 2, 128 * 1024 * 1024
    else:                                   # unknown backend: be VMEM-conservative
        tm, splits, default_cap = 256, 1, 64 * 1024 * 1024

    cap = cap if cap is not None else default_cap
    vmem_limit = int(cap * 0.8)             # ~20% headroom for Mosaic internal scratch
    return tm, splits, vmem_limit


def _make_ffn_kernel(approx_gelu):
    gelu = _gelu_tanh if approx_gelu else _gelu_erf

    def kernel(x_ref, w1_hbm, b1_hbm, w2_hbm, b2_hbm, w3_hbm, b3_hbm, o_ref,
               w1_v, b1_v, w2_v, b2_v, w3_v, b3_v, sem):
        # One-time load (per core / per outer split) of all weights & biases into
        # persistent VMEM scratch. Scratch survives grid iterations, so inner steps > 0
        # reuse the resident copy with zero extra HBM traffic and a single VMEM buffer.
        @pl.when(pl.program_id(1) == 0)
        def _load_weights():
            copies = (
                pltpu.make_async_copy(w1_hbm, w1_v, sem.at[0]),
                pltpu.make_async_copy(b1_hbm, b1_v, sem.at[1]),
                pltpu.make_async_copy(w2_hbm, w2_v, sem.at[2]),
                pltpu.make_async_copy(b2_hbm, b2_v, sem.at[3]),
                pltpu.make_async_copy(w3_hbm, w3_v, sem.at[4]),
                pltpu.make_async_copy(b3_hbm, b3_v, sem.at[5]),
            )
            for c in copies:
                c.start()
            for c in copies:
                c.wait()

        # In-kernel cast of the streamed activation tile (VPU filler hidden under MXU).
        # MXU matmuls accumulate in f32; bias-add + GELU stay in f32.
        x = x_ref[...].astype(w1_v.dtype)

        h1 = jnp.dot(x, w1_v[...], preferred_element_type=jnp.float32) + b1_v[...]
        h1 = gelu(h1).astype(w2_v.dtype)

        h2 = jnp.dot(h1, w2_v[...], preferred_element_type=jnp.float32) + b2_v[...]
        h2 = gelu(h2).astype(w3_v.dtype)

        h3 = jnp.dot(h2, w3_v[...], preferred_element_type=jnp.float32) + b3_v[...]
        o_ref[...] = h3.astype(o_ref.dtype)

    return kernel


def prepare_params(params, *, compute_dtype=jnp.bfloat16):
    """Pad (to 128-lane multiples) and cast weights/biases ONCE at model-setup time.

    Zero-padding is exact: padded weight/bias entries are 0 and GELU(0) = 0, so padded
    lanes contribute nothing; they are sliced away in feed_forward().
    """
    w1, b1, w2, b2, w3, b3 = params
    n_embd, h1_dim = w1.shape
    h2_dim = w2.shape[1]
    e_pad, h1_pad, h2_pad = (_round_up(d, 128) for d in (n_embd, h1_dim, h2_dim))
    b1 = jnp.asarray(b1).reshape(1, -1)
    b2 = jnp.asarray(b2).reshape(1, -1)
    b3 = jnp.asarray(b3).reshape(1, -1)
    return {
        "w1": _pad2d(jnp.asarray(w1), e_pad, h1_pad).astype(compute_dtype),
        "b1": _pad2d(b1, 1, h1_pad).astype(jnp.float32),
        "w2": _pad2d(jnp.asarray(w2), h1_pad, h2_pad).astype(compute_dtype),
        "b2": _pad2d(b2, 1, h2_pad).astype(jnp.float32),
        "w3": _pad2d(jnp.asarray(w3), h2_pad, e_pad).astype(compute_dtype),
        "b3": _pad2d(b3, 1, e_pad).astype(jnp.float32),
        "n_embd": n_embd,
        "e_pad": e_pad, "h1_pad": h1_pad, "h2_pad": h2_pad,
        "compute_dtype": compute_dtype,
    }


def feed_forward(x, params, *, tm=None, n_core_splits=None, vmem_limit_bytes=None,
                 compute_dtype=jnp.bfloat16, out_dtype=None, approx_gelu=False):
    """x: [B, T, n_embd]. params: raw (w1,b1,w2,b2,w3,b3) tuple or prepare_params(...) dict.

    Returns [B, T, n_embd] in out_dtype (default x.dtype; pass bf16 if the consumer
    accepts it to halve writeback traffic).
    """
    if not isinstance(params, dict):
        # NOTE: prefer calling prepare_params() once and reusing the result --
        # this path re-pads / re-casts the weights on every call.
        params = prepare_params(params, compute_dtype=compute_dtype)
    p = params

    B, T, n_embd = x.shape
    assert n_embd == p["n_embd"], "x feature dim does not match prepared params"
    e_pad, h1_pad, h2_pad = p["e_pad"], p["h1_pad"], p["h2_pad"]
    cdt = p["compute_dtype"]
    out_dtype = x.dtype if out_dtype is None else out_dtype

    tm_def, splits_def, vmem_def = _chip_defaults()
    tm = tm_def if tm is None else tm
    n_core_splits = splits_def if n_core_splits is None else n_core_splits
    vmem_limit_bytes = vmem_def if vmem_limit_bytes is None else vmem_limit_bytes

    M = B * T
    if M < 16:
        n_core_splits = 1  # not enough rows to be worth a second TensorCore

    # Row tiling: clamp tile for small inputs, then pad rows so the grid covers exactly.
    rows_per_split = _cdiv(M, n_core_splits)
    tm_eff = min(tm, _round_up(max(rows_per_split, 1), 8))
    n_inner = _cdiv(rows_per_split, tm_eff)
    M_pad = n_core_splits * n_inner * tm_eff

    # x is streamed in its ORIGINAL dtype; the compute-dtype cast happens in-kernel.
    # Padded rows produce GELU(bias) garbage and are sliced off below -- keep that slice.
    x2d = _pad2d(x.reshape(M, n_embd), M_pad, e_pad)

    grid = (n_core_splits, n_inner)

    def row_map(o, i):
        return (o * n_inner + i, 0)

    out2d = pl.pallas_call(
        _make_ffn_kernel(approx_gelu),
        out_shape=jax.ShapeDtypeStruct((M_pad, e_pad), out_dtype),
        grid_spec=pltpu.PrefetchScalarGridSpec(
            num_scalar_prefetch=0,
            grid=grid,
            in_specs=[
                pl.BlockSpec((tm_eff, e_pad), row_map),  # x rows (streamed, pipelined)
                pl.BlockSpec(memory_space=pl.ANY),       # w1 (HBM, copied once to scratch)
                pl.BlockSpec(memory_space=pl.ANY),       # b1
                pl.BlockSpec(memory_space=pl.ANY),       # w2
                pl.BlockSpec(memory_space=pl.ANY),       # b2
                pl.BlockSpec(memory_space=pl.ANY),       # w3
                pl.BlockSpec(memory_space=pl.ANY),       # b3
            ],
            out_specs=pl.BlockSpec((tm_eff, e_pad), row_map),
            scratch_shapes=[
                pltpu.VMEM((e_pad, h1_pad), cdt),        # w1 resident (single copy)
                pltpu.VMEM((1, h1_pad), jnp.float32),    # b1
                pltpu.VMEM((h1_pad, h2_pad), cdt),       # w2 resident
                pltpu.VMEM((1, h2_pad), jnp.float32),    # b2
                pltpu.VMEM((h2_pad, e_pad), cdt),        # w3 resident
                pltpu.VMEM((1, e_pad), jnp.float32),     # b3
                pltpu.SemaphoreType.DMA((6,)),
            ],
        ),
        compiler_params=pltpu.CompilerParams(
            dimension_semantics=("parallel", "arbitrary"),
            vmem_limit_bytes=vmem_limit_bytes,
        ),
    )(x2d, p["w1"], p["b1"], p["w2"], p["b2"], p["w3"], p["b3"])

    return out2d[:M, :n_embd].reshape(B, T, n_embd)


def init_params(key, n_embd):
    """Deterministic init mimicking nn.Linear defaults (U(-1/sqrt(fan_in), +))."""
    dims = [(n_embd, 4 * n_embd), (4 * n_embd, 2 * n_embd), (2 * n_embd, n_embd)]
    params = []
    keys = jax.random.split(key, 2 * len(dims))
    for li, (fin, fout) in enumerate(dims):
        bound = 1.0 / math.sqrt(fin)
        w = jax.random.uniform(keys[2 * li], (fin, fout), jnp.float32, -bound, bound)
        b = jax.random.uniform(keys[2 * li + 1], (1, fout), jnp.float32, -bound, bound)
        params += [w, b]
    return tuple(params)


def feed_forward_ref(x, params):
    w1, b1, w2, b2, w3, b3 = params
    h = _gelu_erf(x @ w1 + b1)
    h = _gelu_erf(h @ w2 + b2)
    return h @ w3 + b3


if __name__ == "__main__":
    n_embd = 32
    B, T = 2, 8
    key = jax.random.PRNGKey(0)
    kx, kp = jax.random.split(key)

    x = jax.random.normal(kx, (B, T, n_embd), dtype=jnp.float32)
    params = init_params(kp, n_embd)

    ref = feed_forward_ref(x, params)

    # f32 compute path: must match the f32 reference tightly (padding adds exact zeros).
    prep_f32 = prepare_params(params, compute_dtype=jnp.float32)
    out_f32 = jax.block_until_ready(feed_forward(x, prep_f32))
    assert out_f32.shape == (B, T, n_embd)
    assert jnp.allclose(out_f32, ref, atol=1e-4, rtol=1e-4), "f32 mismatch vs reference"

    # Default fast path: bf16 resident weights with f32 MXU accumulation.
    prep_bf16 = prepare_params(params)  # pad + cast once; reuse across calls
    out = jax.block_until_ready(feed_forward(x, prep_bf16))
    assert out.shape == (B, T, n_embd)
    assert jnp.allclose(out, ref, atol=5e-2, rtol=5e-2), "bf16 mismatch vs reference"

    print("KERNEL_OK")
</pallas_src>

<mosaic_0001>
module attributes {stable_mosaic.version = 11 : i64} {
  func.func @kernel(%arg0: i32, %arg1: i32, %arg2: memref<16x128xf32, #tpu.memory_space<vmem>>, %arg3: memref<128x128xf32, #tpu.memory_space<any>>, %arg4: memref<1x128xf32, #tpu.memory_space<any>>, %arg5: memref<128x128xf32, #tpu.memory_space<any>>, %arg6: memref<1x128xf32, #tpu.memory_space<any>>, %arg7: memref<128x128xf32, #tpu.memory_space<any>>, %arg8: memref<1x128xf32, #tpu.memory_space<any>>, %arg9: memref<16x128xf32, #tpu.memory_space<vmem>>, %arg10: memref<128x128xf32, #tpu.memory_space<vmem>>, %arg11: memref<1x128xf32, #tpu.memory_space<vmem>>, %arg12: memref<128x128xf32, #tpu.memory_space<vmem>>, %arg13: memref<1x128xf32, #tpu.memory_space<vmem>>, %arg14: memref<128x128xf32, #tpu.memory_space<vmem>>, %arg15: memref<1x128xf32, #tpu.memory_space<vmem>>, %arg16: memref<6x!tpu.dma_semaphore, #tpu.memory_space<semaphore_mem>>) attributes {dimension_semantics = [#tpu.dimension_semantics<parallel>, #tpu.dimension_semantics<arbitrary>], iteration_bounds = array<i64: 1, 1>, scalar_prefetch = 0 : i64, scratch_operands = 7 : i64, tpu.core_type = #tpu.core_type<tc>, window_params = [{transform_indices = @transform_0, window_bounds = array<i64: 16, 128>}, {}, {}, {}, {}, {}, {}, {transform_indices = @transform_7, window_bounds = array<i64: 16, 128>}]} {
    %c0_i32 = arith.constant 0 : i32
    %0 = arith.cmpi eq, %arg1, %c0_i32 : i32
    %1 = arith.extui %0 : i1 to i32
    %c0_i32_0 = arith.constant 0 : i32
    %2 = arith.cmpi ne, %1, %c0_i32_0 : i32
    scf.if %2 {
      %c0_i32_24 = arith.constant 0 : i32
      %36 = tpu.memref_slice %arg16[%c0_i32_24] : memref<6x!tpu.dma_semaphore, #tpu.memory_space<semaphore_mem>> -> memref<1x!tpu.dma_semaphore, #tpu.memory_space<semaphore_mem>>
      %37 = tpu.memref_squeeze %36 : memref<1x!tpu.dma_semaphore, #tpu.memory_space<semaphore_mem>> -> memref<!tpu.dma_semaphore, #tpu.memory_space<semaphore_mem>>
      tpu.enqueue_dma source(%arg3 : memref<128x128xf32, #tpu.memory_space<any>>) target(%arg10 : memref<128x128xf32, #tpu.memory_space<vmem>>) target_semaphore(%37 : memref<!tpu.dma_semaphore, #tpu.memory_space<semaphore_mem>>)
      %c1_i32 = arith.constant 1 : i32
      %38 = tpu.memref_slice %arg16[%c1_i32] : memref<6x!tpu.dma_semaphore, #tpu.memory_space<semaphore_mem>> -> memref<1x!tpu.dma_semaphore, #tpu.memory_space<semaphore_mem>>
      %39 = tpu.memref_squeeze %38 : memref<1x!tpu.dma_semaphore, #tpu.memory_space<semaphore_mem>> -> memref<!tpu.dma_semaphore, #tpu.memory_space<semaphore_mem>>
      tpu.enqueue_dma source(%arg4 : memref<1x128xf32, #tpu.memory_space<any>>) target(%arg11 : memref<1x128xf32, #tpu.memory_space<vmem>>) target_semaphore(%39 : memref<!tpu.dma_semaphore, #tpu.memory_space<semaphore_mem>>)
      %c2_i32 = arith.constant 2 : i32
      %40 = tpu.memref_slice %arg16[%c2_i32] : memref<6x!tpu.dma_semaphore, #tpu.memory_space<semaphore_mem>> -> memref<1x!tpu.dma_semaphore, #tpu.memory_space<semaphore_mem>>
      %41 = tpu.memref_squeeze %40 : memref<1x!tpu.dma_semaphore, #tpu.memory_space<semaphore_mem>> -> memref<!tpu.dma_semaphore, #tpu.memory_space<semaphore_mem>>
      tpu.enqueue_dma source(%arg5 : memref<128x128xf32, #tpu.memory_space<any>>) target(%arg12 : memref<128x128xf32, #tpu.memory_space<vmem>>) target_semaphore(%41 : memref<!tpu.dma_semaphore, #tpu.memory_space<semaphore_mem>>)
      %c3_i32 = arith.constant 3 : i32
      %42 = tpu.memref_slice %arg16[%c3_i32] : memref<6x!tpu.dma_semaphore, #tpu.memory_space<semaphore_mem>> -> memref<1x!tpu.dma_semaphore, #tpu.memory_space<semaphore_mem>>
      %43 = tpu.memref_squeeze %42 : memref<1x!tpu.dma_semaphore, #tpu.memory_space<semaphore_mem>> -> memref<!tpu.dma_semaphore, #tpu.memory_space<semaphore_mem>>
      tpu.enqueue_dma source(%arg6 : memref<1x128xf32, #tpu.memory_space<any>>) target(%arg13 : memref<1x128xf32, #tpu.memory_space<vmem>>) target_semaphore(%43 : memref<!tpu.dma_semaphore, #tpu.memory_space<semaphore_mem>>)
      %c4_i32 = arith.constant 4 : i32
      %44 = tpu.memref_slice %arg16[%c4_i32] : memref<6x!tpu.dma_semaphore, #tpu.memory_space<semaphore_mem>> -> memref<1x!tpu.dma_semaphore, #tpu.memory_space<semaphore_mem>>
      %45 = tpu.memref_squeeze %44 : memref<1x!tpu.dma_semaphore, #tpu.memory_space<semaphore_mem>> -> memref<!tpu.dma_semaphore, #tpu.memory_space<semaphore_mem>>
      tpu.enqueue_dma source(%arg7 : memref<128x128xf32, #tpu.memory_space<any>>) target(%arg14 : memref<128x128xf32, #tpu.memory_space<vmem>>) target_semaphore(%45 : memref<!tpu.dma_semaphore, #tpu.memory_space<semaphore_mem>>)
      %c5_i32 = arith.constant 5 : i32
      %46 = tpu.memref_slice %arg16[%c5_i32] : memref<6x!tpu.dma_semaphore, #tpu.memory_space<semaphore_mem>> -> memref<1x!tpu.dma_semaphore, #tpu.memory_space<semaphore_mem>>
      %47 = tpu.memref_squeeze %46 : memref<1x!tpu.dma_semaphore, #tpu.memory_space<semaphore_mem>> -> memref<!tpu.dma_semaphore, #tpu.memory_space<semaphore_mem>>
      tpu.enqueue_dma source(%arg8 : memref<1x128xf32, #tpu.memory_space<any>>) target(%arg15 : memref<1x128xf32, #tpu.memory_space<vmem>>) target_semaphore(%47 : memref<!tpu.dma_semaphore, #tpu.memory_space<semaphore_mem>>)
      %c0_i32_25 = arith.constant 0 : i32
      %48 = tpu.memref_slice %arg16[%c0_i32_25] : memref<6x!tpu.dma_semaphore, #tpu.memory_space<semaphore_mem>> -> memref<1x!tpu.dma_semaphore, #tpu.memory_space<semaphore_mem>>
      %49 = tpu.memref_squeeze %48 : memref<1x!tpu.dma_semaphore, #tpu.memory_space<semaphore_mem>> -> memref<!tpu.dma_semaphore, #tpu.memory_space<semaphore_mem>>
      tpu.wait_dma2 semaphore(%49 : memref<!tpu.dma_semaphore, #tpu.memory_space<semaphore_mem>>) src(%arg3 : memref<128x128xf32, #tpu.memory_space<any>>) dst(%arg10 : memref<128x128xf32, #tpu.memory_space<vmem>>)
      %c1_i32_26 = arith.constant 1 : i32
      %50 = tpu.memref_slice %arg16[%c1_i32_26] : memref<6x!tpu.dma_semaphore, #tpu.memory_space<semaphore_mem>> -> memref<1x!tpu.dma_semaphore, #tpu.memory_space<semaphore_mem>>
      %51 = tpu.memref_squeeze %50 : memref<1x!tpu.dma_semaphore, #tpu.memory_space<semaphore_mem>> -> memref<!tpu.dma_semaphore, #tpu.memory_space<semaphore_mem>>
      tpu.wait_dma2 semaphore(%51 : memref<!tpu.dma_semaphore, #tpu.memory_space<semaphore_mem>>) src(%arg4 : memref<1x128xf32, #tpu.memory_space<any>>) dst(%arg11 : memref<1x128xf32, #tpu.memory_space<vmem>>)
      %c2_i32_27 = arith.constant 2 : i32
      %52 = tpu.memref_slice %arg16[%c2_i32_27] : memref<6x!tpu.dma_semaphore, #tpu.memory_space<semaphore_mem>> -> memref<1x!tpu.dma_semaphore, #tpu.memory_space<semaphore_mem>>
      %53 = tpu.memref_squeeze %52 : memref<1x!tpu.dma_semaphore, #tpu.memory_space<semaphore_mem>> -> memref<!tpu.dma_semaphore, #tpu.memory_space<semaphore_mem>>
      tpu.wait_dma2 semaphore(%53 : memref<!tpu.dma_semaphore, #tpu.memory_space<semaphore_mem>>) src(%arg5 : memref<128x128xf32, #tpu.memory_space<any>>) dst(%arg12 : memref<128x128xf32, #tpu.memory_space<vmem>>)
      %c3_i32_28 = arith.constant 3 : i32
      %54 = tpu.memref_slice %arg16[%c3_i32_28] : memref<6x!tpu.dma_semaphore, #tpu.memory_space<semaphore_mem>> -> memref<1x!tpu.dma_semaphore, #tpu.memory_space<semaphore_mem>>
      %55 = tpu.memref_squeeze %54 : memref<1x!tpu.dma_semaphore, #tpu.memory_space<semaphore_mem>> -> memref<!tpu.dma_semaphore, #tpu.memory_space<semaphore_mem>>
      tpu.wait_dma2 semaphore(%55 : memref<!tpu.dma_semaphore, #tpu.memory_space<semaphore_mem>>) src(%arg6 : memref<1x128xf32, #tpu.memory_space<any>>) dst(%arg13 : memref<1x128xf32, #tpu.memory_space<vmem>>)
      %c4_i32_29 = arith.constant 4 : i32
      %56 = tpu.memref_slice %arg16[%c4_i32_29] : memref<6x!tpu.dma_semaphore, #tpu.memory_space<semaphore_mem>> -> memref<1x!tpu.dma_semaphore, #tpu.memory_space<semaphore_mem>>
      %57 = tpu.memref_squeeze %56 : memref<1x!tpu.dma_semaphore, #tpu.memory_space<semaphore_mem>> -> memref<!tpu.dma_semaphore, #tpu.memory_space<semaphore_mem>>
      tpu.wait_dma2 semaphore(%57 : memref<!tpu.dma_semaphore, #tpu.memory_space<semaphore_mem>>) src(%arg7 : memref<128x128xf32, #tpu.memory_space<any>>) dst(%arg14 : memref<128x128xf32, #tpu.memory_space<vmem>>)
      %c5_i32_30 = arith.constant 5 : i32
      %58 = tpu.memref_slice %arg16[%c5_i32_30] : memref<6x!tpu.dma_semaphore, #tpu.memory_space<semaphore_mem>> -> memref<1x!tpu.dma_semaphore, #tpu.memory_space<semaphore_mem>>
      %59 = tpu.memref_squeeze %58 : memref<1x!tpu.dma_semaphore, #tpu.memory_space<semaphore_mem>> -> memref<!tpu.dma_semaphore, #tpu.memory_space<semaphore_mem>>
      tpu.wait_dma2 semaphore(%59 : memref<!tpu.dma_semaphore, #tpu.memory_space<semaphore_mem>>) src(%arg8 : memref<1x128xf32, #tpu.memory_space<any>>) dst(%arg15 : memref<1x128xf32, #tpu.memory_space<vmem>>)
    } else {
    }
    %c0 = arith.constant 0 : index
    %c0_1 = arith.constant 0 : index
    %3 = vector.load %arg2[%c0, %c0_1] : memref<16x128xf32, #tpu.memory_space<vmem>>, vector<16x128xf32>
    %c0_2 = arith.constant 0 : index
    %c0_3 = arith.constant 0 : index
    %4 = vector.load %arg10[%c0_2, %c0_3] : memref<128x128xf32, #tpu.memory_space<vmem>>, vector<128x128xf32>
    %cst = arith.constant dense<0.000000e+00> : vector<16x128xf32>
    %5 = tpu.matmul %3, %4, %cst {dimension_numbers = #tpu.dot_dimension_numbers<[1], [0], [0], [1], [0, 0, 1, 1], [], []>} : vector<16x128xf32>, vector<128x128xf32>, vector<16x128xf32> -> vector<16x128xf32>
    %c0_4 = arith.constant 0 : index
    %c0_5 = arith.constant 0 : index
    %6 = vector.load %arg11[%c0_4, %c0_5] : memref<1x128xf32, #tpu.memory_space<vmem>>, vector<1x128xf32>
    %7 = vector.broadcast %6 : vector<1x128xf32> to vector<16x128xf32>
    %8 = arith.addf %5, %7 : vector<16x128xf32>
    %cst_6 = arith.constant 5.000000e-01 : f32
    %9 = vector.broadcast %cst_6 : f32 to vector<16x128xf32>
    %10 = arith.mulf %9, %8 : vector<16x128xf32>
    %cst_7 = arith.constant 0.707106769 : f32
    %11 = vector.broadcast %cst_7 : f32 to vector<16x128xf32>
    %12 = arith.mulf %8, %11 : vector<16x128xf32>
    %13 = math.erf %12 : vector<16x128xf32>
    %cst_8 = arith.constant 1.000000e+00 : f32
    %14 = vector.broadcast %cst_8 : f32 to vector<16x128xf32>
    %15 = arith.addf %14, %13 : vector<16x128xf32>
    %16 = arith.mulf %10, %15 : vector<16x128xf32>
    %c0_9 = arith.constant 0 : index
    %c0_10 = arith.constant 0 : index
    %17 = vector.load %arg12[%c0_9, %c0_10] : memref<128x128xf32, #tpu.memory_space<vmem>>, vector<128x128xf32>
    %cst_11 = arith.constant dense<0.000000e+00> : vector<16x128xf32>
    %18 = tpu.matmul %16, %17, %cst_11 {dimension_numbers = #tpu.dot_dimension_numbers<[1], [0], [0], [1], [0, 0, 1, 1], [], []>} : vector<16x128xf32>, vector<128x128xf32>, vector<16x128xf32> -> vector<16x128xf32>
    %c0_12 = arith.constant 0 : index
    %c0_13 = arith.constant 0 : index
    %19 = vector.load %arg13[%c0_12, %c0_13] : memref<1x128xf32, #tpu.memory_space<vmem>>, vector<1x128xf32>
    %20 = vector.broadcast %19 : vector<1x128xf32> to vector<16x128xf32>
    %21 = arith.addf %18, %20 : vector<16x128xf32>
    %cst_14 = arith.constant 5.000000e-01 : f32
    %22 = vector.broadcast %cst_14 : f32 to vector<16x128xf32>
    %23 = arith.mulf %22, %21 : vector<16x128xf32>
    %cst_15 = arith.constant 0.707106769 : f32
    %24 = vector.broadcast %cst_15 : f32 to vector<16x128xf32>
    %25 = arith.mulf %21, %24 : vector<16x128xf32>
    %26 = math.erf %25 : vector<16x128xf32>
    %cst_16 = arith.constant 1.000000e+00 : f32
    %27 = vector.broadcast %cst_16 : f32 to vector<16x128xf32>
    %28 = arith.addf %27, %26 : vector<16x128xf32>
    %29 = arith.mulf %23, %28 : vector<16x128xf32>
    %c0_17 = arith.constant 0 : index
    %c0_18 = arith.constant 0 : index
    %30 = vector.load %arg14[%c0_17, %c0_18] : memref<128x128xf32, #tpu.memory_space<vmem>>, vector<128x128xf32>
    %cst_19 = arith.constant dense<0.000000e+00> : vector<16x128xf32>
    %31 = tpu.matmul %29, %30, %cst_19 {dimension_numbers = #tpu.dot_dimension_numbers<[1], [0], [0], [1], [0, 0, 1, 1], [], []>} : vector<16x128xf32>, vector<128x128xf32>, vector<16x128xf32> -> vector<16x128xf32>
    %c0_20 = arith.constant 0 : index
    %c0_21 = arith.constant 0 : index
    %32 = vector.load %arg15[%c0_20, %c0_21] : memref<1x128xf32, #tpu.memory_space<vmem>>, vector<1x128xf32>
    %33 = vector.broadcast %32 : vector<1x128xf32> to vector<16x128xf32>
    %34 = arith.addf %31, %33 : vector<16x128xf32>
    %c0_22 = arith.constant 0 : index
    %c0_23 = arith.constant 0 : index
    %35 = vector.load %arg9[%c0_22, %c0_23] : memref<16x128xf32, #tpu.memory_space<vmem>>, vector<16x128xf32>
    tpu.vector_store %arg9[%c0_22, %c0_23], %34 {strides = array<i32>} : memref<16x128xf32, #tpu.memory_space<vmem>>, vector<16x128xf32>,
    return
  }
  func.func @transform_0(%arg0: i32, %arg1: i32) -> (i32, i32) {
    %c1_i32 = arith.constant 1 : i32
    %0 = arith.muli %arg0, %c1_i32 : i32
    %1 = arith.addi %0, %arg1 : i32
    %c0_i32 = arith.constant 0 : i32
    %c0_i32_0 = arith.constant 0 : i32
    return %1, %c0_i32 : i32, i32
  }
  func.func @transform_7(%arg0: i32, %arg1: i32) -> (i32, i32) {
    %c1_i32 = arith.constant 1 : i32
    %0 = arith.muli %arg0, %c1_i32 : i32
    %1 = arith.addi %0, %arg1 : i32
    %c0_i32 = arith.constant 0 : i32
    %c0_i32_0 = arith.constant 0 : i32
    return %1, %c0_i32 : i32, i32
  }
}

</mosaic_0001>

<llo_original>
// kernel: tpu_custom_call.1
$region0: #{tpu_custom_call.1}
  #allocation0 [shape = 'u32[]', space=smem, size = 0x4, offset = 0x4, fixed_abs, tag = 'smem constant byte address 0x4 - core index']
  #allocation1 [shape = 'u32[144,128]{1,0:T(1,128)}', space=vmem, size = 0x12000, scoped, tag = 'internal scratch']
  #allocation2 [shape = 'f32[128,128]{1,0:T(8,128)}', space=vmem, size = 0x10000, scoped, tag = 'scratch operand']
  #allocation3 [shape = 'f32[1,128]{1,0:T(1,128)}', space=vmem, size = 0x200, scoped, tag = 'scratch operand']
  #allocation4 [shape = 'f32[128,128]{1,0:T(8,128)}', space=vmem, size = 0x10000, scoped, tag = 'scratch operand']
  #allocation5 [shape = 'f32[1,128]{1,0:T(1,128)}', space=vmem, size = 0x200, scoped, tag = 'scratch operand']
  #allocation6 [shape = 'f32[128,128]{1,0:T(8,128)}', space=vmem, size = 0x10000, scoped, tag = 'scratch operand']
  #allocation7 [shape = 'f32[1,128]{1,0:T(1,128)}', space=vmem, size = 0x200, scoped, tag = 'scratch operand']
  #allocation8 [shape = 's32[6]{0}', space=sflag, size = 0x18, scoped, tag = 'scratch operand']
  #allocation13 [shape = 's32[]', space=sflag, size = 0x4, offset = 0, fixed_abs, tag = 'sflag constant byte address 0x0 - dummy sync flag']
  #allocation14 [shape = 's32[]', space=sflag, size = 0x4, offset = 0, fixed_abs, tag = 'sflag constant byte address 0x0 - dummy sync flag']
  #allocation15 [shape = 'u32[]', space=smem, size = 0x4, offset = 0x44, fixed_abs, tag = 'smem constant byte address 0x44 - assertion arg 0']
  #allocation16 [shape = 'u32[]', space=smem, size = 0x4, offset = 0x48, fixed_abs, tag = 'smem constant byte address 0x48 - assertion arg 1']
  #allocation17 [shape = 's32[]', space=sflag, size = 0x4, offset = 0, fixed_abs, tag = 'sflag constant byte address 0x0 - dummy sync flag']
  #allocation18 [shape = 's32[]', space=sflag, size = 0x4, offset = 0, fixed_abs, tag = 'sflag constant byte address 0x0 - dummy sync flag']
  #allocation19 [shape = 's32[]', space=sflag, size = 0x4, offset = 0, fixed_abs, tag = 'sflag constant byte address 0x0 - dummy sync flag']
  #allocation20 [shape = 's32[]', space=sflag, size = 0x4, offset = 0, fixed_abs, tag = 'sflag constant byte address 0x0 - dummy sync flag']
  #allocation21 [shape = 's32[]', space=sflag, size = 0x4, offset = 0, fixed_abs, tag = 'sflag constant byte address 0x0 - dummy sync flag']
  #allocation22 [shape = 's32[]', space=sflag, size = 0x4, offset = 0, fixed_abs, tag = 'sflag constant byte address 0x0 - dummy sync flag']
  #allocation23 [shape = 's32[]', space=sflag, size = 0x4, offset = 0, fixed_abs, tag = 'sflag constant byte address 0x0 - dummy sync flag']
  %s0 = inlined_call_operand.hbm [shape: f32[16,128], index: 0, kind: input, shape index: {}]
  %s1 = inlined_call_operand.hbm [shape: f32[128,128], index: 1, kind: input, shape index: {}]
  %s2 = inlined_call_operand.vmem [shape: f32[1,128], index: 2, kind: input, shape index: {}]
  %s3 = inlined_call_operand.hbm [shape: f32[128,128], index: 3, kind: input, shape index: {}]
  %s4 = inlined_call_operand.vmem [shape: f32[1,128], index: 4, kind: input, shape index: {}]
  %s5 = inlined_call_operand.hbm [shape: f32[128,128], index: 5, kind: input, shape index: {}]
  %s6 = inlined_call_operand.vmem [shape: f32[1,128], index: 6, kind: input, shape index: {}]
  %s7 = inlined_call_operand.hbm [shape: f32[16,128], index: 7, kind: output, shape index: {}]
  %s8 = sld [smem:[#allocation0]]
  $region124: #{tpu_custom_call.1} parent=0
    _
  %s10 = ssub.s32 1, %s8
  %s11 = scalar_select 0, %s10, %s8
  $region1: #{tpu_custom_call.1} parent=0
    #allocation9 [shape = 'u8[8192]{0}', space=vmem, size = 0x2000, scoped, tag = 'input window, operand 0, single buffered']
    #allocation10 [shape = 's32[1]{0}', space=sflag, size = 0x4, scoped, tag = 'scoped memory for tpu_custom_call.1']
    #allocation11 [shape = 's32[1]{0}', space=sflag, size = 0x4, scoped, tag = 'scoped memory for tpu_custom_call.1']
    #allocation12 [shape = 'u8[8192]{0}', space=vmem, size = 0x2000, scoped, tag = 'output window, operand 0, single buffered']
    %12 = vsyncpa [#allocation10], 0
    %13 = vsyncpa [#allocation11], 0
    // Predicated region
    $region2: #{tpu_custom_call.1} parent=1 // pred_check
      _
    $region3: #{tpu_custom_call.1} parent=1 // pred_check_branch
      %15 = sbr.rel (0) target = $region5
    $region4: #{tpu_custom_call.1} parent=1 // pred_region
      %s16 = sadd.s32 0, 0
      %s17 = smul.u32 2, %s16
      %s19 = ssub.s32 256, 256
      %20 = vsyncadd [#allocation10], %s19
      %s21 = smul.addr %s17, 128
      %s22 = scalar_lea.hbm %s0, %s21
      %s23 = sshll.u32 [#allocation9], 4
      %s24 = int_to_ptr.vmem [resolvable:$true] %s23
      %29 = dma.hbm_to_vmem [thread:$0]  %s22, 256, %s24, [#allocation10], 128, 128, 8
    $region5: #{tpu_custom_call.1} parent=1 // pred_fallthru
      _
    // Predicated region
    $region6: #{tpu_custom_call.1} parent=1 // pred_check
      _
    $region7: #{tpu_custom_call.1} parent=1 // pred_check_branch
      %31 = sbr.rel (0) target = $region9
    $region8: #{tpu_custom_call.1} parent=1 // pred_region
      %32 = dma.done [#allocation10], 256
    $region9: #{tpu_custom_call.1} parent=1 // pred_fallthru
      _
    %s33 = sadd.s32 0, 0
    %s34 = smul.u32 2, %s33
    %s35 = sadd.s32 0, 0
    %s36 = smul.u32 2, %s35
    %p37 = scmp.eq.s32.totalorder 0, 0
    // Predicated region
    $region10: #{tpu_custom_call.1} parent=1 // pred_check
      %p38 = pneg %p37
    $region11: #{tpu_custom_call.1} parent=1 // pred_check_branch
      %40 = sbr.rel (%p38) target = $region13
    $region12: #{tpu_custom_call.1} parent=1 // pred_region
      // Predicated region
      $region14: #{tpu_custom_call.1} parent=12 // pred_check
        _
      $region15: #{tpu_custom_call.1} parent=12 // pred_check_branch
        %42 = sbr.rel target = $region17
      $region16: #{tpu_custom_call.1} parent=12 // pred_region
        %43 = sst [smem:[#allocation15]] [#allocation14]
        %44 = sst [smem:[#allocation16]] [#allocation13]
      $region17: #{tpu_custom_call.1} parent=12 // pred_fallthru
        _
      %46 = shalt.err (0)
      %s48 = sshll.u32 [#allocation2], 4
      %s49 = int_to_ptr.vmem [resolvable:$true] %s48
      %51 = dma.hbm_to_vmem [thread:$0]  %s1, 2048, %s49, [#allocation8]
      %s52 = scalar_lea.sflag [#allocation8], 1
      %p54 = scmp.lt.u32.totalorder 1, 8
      %p55 = pneg %p54
      // Predicated region
      $region18: #{tpu_custom_call.1} parent=12 // pred_check
        _
      $region19: #{tpu_custom_call.1} parent=12 // pred_check_branch
        %57 = sbr.rel (%p54) target = $region21
      $region20: #{tpu_custom_call.1} parent=12 // pred_region
        %s73 = sand.u32 1, 7
        %p74 = scmp.eq.s32.totalorder %s73, 0
        %p75 = pneg %p74
        // Predicated region
        $region33: #{tpu_custom_call.1} parent=20 // pred_check
          _
        $region34: #{tpu_custom_call.1} parent=20 // pred_check_branch
          %77 = sbr.rel (%p74) target = $region36
        $region35: #{tpu_custom_call.1} parent=20 // pred_region
          %s78 = sand.u32 1, 7
          %s79 = ssub.s32 1, %s78
          %s80 = scalar_lea.vmem %s2, %s79
          %s81 = ssub.s32 1, %s78
          %s82 = scalar_lea.vmem [#allocation3], %s81
          %s83 = sshll.u32 1, %s78
          %s84 = ssub.s32 %s83, 1
          loop: start=0, step=1, limit=1
          $region37: #{tpu_custom_call.1} parent=35 // loop_pre_header
            _
          $region38: #{tpu_custom_call.1} parent=35 // loop_header
            %s86 = sphi 0, %s90
            %p87 = scmp.ge.s32.totalorder %s86, 1
            %s91 = sphi %s80, %s80
            %s92 = sphi %s82, %s82
          $region39: #{tpu_custom_call.1} parent=35 // loop_header_branch
            %89 = sbr.rel (%p87) target = $region43
          $region40: #{tpu_custom_call.1} parent=35 // loop_body
            %v93 = vld [vmem:[%s91] sm:%s84]
            %94 = vst [vmem:[%s92] sm:%s84] %v93
          $region41: #{tpu_custom_call.1} parent=35 // loop_footer
            %s90 = sadd.s32 1, %s86
          $region42: #{tpu_custom_call.1} parent=35 // loop_footer_branch
            %85 = sbr.rel target = $region38
          $region43: #{tpu_custom_call.1} parent=35 // loop_exit
            _
        $region36: #{tpu_custom_call.1} parent=20 // pred_fallthru
          _
      $region21: #{tpu_custom_call.1} parent=12 // pred_fallthru
        _
      // Predicated region
      $region22: #{tpu_custom_call.1} parent=12 // pred_check
        %p58 = pneg %p54
      $region23: #{tpu_custom_call.1} parent=12 // pred_check_branch
        %60 = sbr.rel (%p58) target = $region25
      $region24: #{tpu_custom_call.1} parent=12 // pred_region
        %s61 = sshll.u32 1, 1
        %s62 = ssub.s32 %s61, 1
        loop: start=0, step=1, limit=1
        $region26: #{tpu_custom_call.1} parent=24 // loop_pre_header
          _
        $region27: #{tpu_custom_call.1} parent=24 // loop_header
          %s64 = sphi 0, %s68
          %p65 = scmp.ge.s32.totalorder %s64, 1
          %s69 = sphi %s2, %s2
          %s70 = sphi [#allocation3], [#allocation3]
        $region28: #{tpu_custom_call.1} parent=24 // loop_header_branch
          %67 = sbr.rel (%p65) target = $region32
        $region29: #{tpu_custom_call.1} parent=24 // loop_body
          %v71 = vld [vmem:[%s69] sm:%s62]
          %72 = vst [vmem:[%s70] sm:%s62] %v71
        $region30: #{tpu_custom_call.1} parent=24 // loop_footer
          %s68 = sadd.s32 1, %s64
        $region31: #{tpu_custom_call.1} parent=24 // loop_footer_branch
          %63 = sbr.rel target = $region27
        $region32: #{tpu_custom_call.1} parent=24 // loop_exit
          _
      $region25: #{tpu_custom_call.1} parent=12 // pred_fallthru
        _
      // Predicated region
      $region44: #{tpu_custom_call.1} parent=12 // pred_check
        _
      $region45: #{tpu_custom_call.1} parent=12 // pred_check_branch
        %97 = sbr.rel (0) target = $region47
      $region46: #{tpu_custom_call.1} parent=12 // pred_region
        %98 = vsyncadd %s52, 16
      $region47: #{tpu_custom_call.1} parent=12 // pred_fallthru
        _
      %s99 = scalar_lea.sflag [#allocation8], 2
      // Predicated region
      $region48: #{tpu_custom_call.1} parent=12 // pred_check
        _
      $region49: #{tpu_custom_call.1} parent=12 // pred_check_branch
        %101 = sbr.rel target = $region51
      $region50: #{tpu_custom_call.1} parent=12 // pred_region
        %102 = sst [smem:[#allocation15]] [#allocation19]
        %103 = sst [smem:[#allocation16]] [#allocation18]
      $region51: #{tpu_custom_call.1} parent=12 // pred_fallthru
        _
      %105 = shalt.err (0)
      %s107 = sshll.u32 [#allocation4], 4
      %s108 = int_to_ptr.vmem [resolvable:$true] %s107
      %110 = dma.hbm_to_vmem [thread:$0]  %s3, 2048, %s108, %s99
      %s111 = scalar_lea.sflag [#allocation8], 3
      %p113 = scmp.lt.u32.totalorder 1, 8
      %p114 = pneg %p113
      // Predicated region
      $region52: #{tpu_custom_call.1} parent=12 // pred_check
        _
      $region53: #{tpu_custom_call.1} parent=12 // pred_check_branch
        %116 = sbr.rel (%p113) target = $region55
      $region54: #{tpu_custom_call.1} parent=12 // pred_region
        %s132 = sand.u32 1, 7
        %p133 = scmp.eq.s32.totalorder %s132, 0
        %p134 = pneg %p133
        // Predicated region
        $region67: #{tpu_custom_call.1} parent=54 // pred_check
          _
        $region68: #{tpu_custom_call.1} parent=54 // pred_check_branch
          %136 = sbr.rel (%p133) target = $region70
        $region69: #{tpu_custom_call.1} parent=54 // pred_region
          %s137 = sand.u32 1, 7
          %s138 = ssub.s32 1, %s137
          %s139 = scalar_lea.vmem %s4, %s138
          %s140 = ssub.s32 1, %s137
          %s141 = scalar_lea.vmem [#allocation5], %s140
          %s142 = sshll.u32 1, %s137
          %s143 = ssub.s32 %s142, 1
          loop: start=0, step=1, limit=1
          $region71: #{tpu_custom_call.1} parent=69 // loop_pre_header
            _
          $region72: #{tpu_custom_call.1} parent=69 // loop_header
            %s145 = sphi 0, %s149
            %p146 = scmp.ge.s32.totalorder %s145, 1
            %s150 = sphi %s139, %s139
            %s151 = sphi %s141, %s141
          $region73: #{tpu_custom_call.1} parent=69 // loop_header_branch
            %148 = sbr.rel (%p146) target = $region77
          $region74: #{tpu_custom_call.1} parent=69 // loop_body
            %v152 = vld [vmem:[%s150] sm:%s143]
            %153 = vst [vmem:[%s151] sm:%s143] %v152
          $region75: #{tpu_custom_call.1} parent=69 // loop_footer
            %s149 = sadd.s32 1, %s145
          $region76: #{tpu_custom_call.1} parent=69 // loop_footer_branch
            %144 = sbr.rel target = $region72
          $region77: #{tpu_custom_call.1} parent=69 // loop_exit
            _
        $region70: #{tpu_custom_call.1} parent=54 // pred_fallthru
          _
      $region55: #{tpu_custom_call.1} parent=12 // pred_fallthru
        _
      // Predicated region
      $region56: #{tpu_custom_call.1} parent=12 // pred_check
        %p117 = pneg %p113
      $region57: #{tpu_custom_call.1} parent=12 // pred_check_branch
        %119 = sbr.rel (%p117) target = $region59
      $region58: #{tpu_custom_call.1} parent=12 // pred_region
        %s120 = sshll.u32 1, 1
        %s121 = ssub.s32 %s120, 1
        loop: start=0, step=1, limit=1
        $region60: #{tpu_custom_call.1} parent=58 // loop_pre_header
          _
        $region61: #{tpu_custom_call.1} parent=58 // loop_header
          %s123 = sphi 0, %s127
          %p124 = scmp.ge.s32.totalorder %s123, 1
          %s128 = sphi %s4, %s4
          %s129 = sphi [#allocation5], [#allocation5]
        $region62: #{tpu_custom_call.1} parent=58 // loop_header_branch
          %126 = sbr.rel (%p124) target = $region66
        $region63: #{tpu_custom_call.1} parent=58 // loop_body
          %v130 = vld [vmem:[%s128] sm:%s121]
          %131 = vst [vmem:[%s129] sm:%s121] %v130
        $region64: #{tpu_custom_call.1} parent=58 // loop_footer
          %s127 = sadd.s32 1, %s123
        $region65: #{tpu_custom_call.1} parent=58 // loop_footer_branch
          %122 = sbr.rel target = $region61
        $region66: #{tpu_custom_call.1} parent=58 // loop_exit
          _
      $region59: #{tpu_custom_call.1} parent=12 // pred_fallthru
        _
      // Predicated region
      $region78: #{tpu_custom_call.1} parent=12 // pred_check
        _
      $region79: #{tpu_custom_call.1} parent=12 // pred_check_branch
        %156 = sbr.rel (0) target = $region81
      $region80: #{tpu_custom_call.1} parent=12 // pred_region
        %157 = vsyncadd %s111, 16
      $region81: #{tpu_custom_call.1} parent=12 // pred_fallthru
        _
      %s158 = scalar_lea.sflag [#allocation8], 4
      // Predicated region
      $region82: #{tpu_custom_call.1} parent=12 // pred_check
        _
      $region83: #{tpu_custom_call.1} parent=12 // pred_check_branch
        %160 = sbr.rel target = $region85
      $region84: #{tpu_custom_call.1} parent=12 // pred_region
        %161 = sst [smem:[#allocation15]] [#allocation22]
        %162 = sst [smem:[#allocation16]] [#allocation21]
      $region85: #{tpu_custom_call.1} parent=12 // pred_fallthru
        _
      %164 = shalt.err (0)
      %s166 = sshll.u32 [#allocation6], 4
      %s167 = int_to_ptr.vmem [resolvable:$true] %s166
      %169 = dma.hbm_to_vmem [thread:$0]  %s5, 2048, %s167, %s158
      %s170 = scalar_lea.sflag [#allocation8], 5
      %p172 = scmp.lt.u32.totalorder 1, 8
      %p173 = pneg %p172
      // Predicated region
      $region86: #{tpu_custom_call.1} parent=12 // pred_check
        _
      $region87: #{tpu_custom_call.1} parent=12 // pred_check_branch
        %175 = sbr.rel (%p172) target = $region89
      $region88: #{tpu_custom_call.1} parent=12 // pred_region
        %s191 = sand.u32 1, 7
        %p192 = scmp.eq.s32.totalorder %s191, 0
        %p193 = pneg %p192
        // Predicated region
        $region101: #{tpu_custom_call.1} parent=88 // pred_check
          _
        $region102: #{tpu_custom_call.1} parent=88 // pred_check_branch
          %195 = sbr.rel (%p192) target = $region104
        $region103: #{tpu_custom_call.1} parent=88 // pred_region
          %s196 = sand.u32 1, 7
          %s197 = ssub.s32 1, %s196
          %s198 = scalar_lea.vmem %s6, %s197
          %s199 = ssub.s32 1, %s196
          %s200 = scalar_lea.vmem [#allocation7], %s199
          %s201 = sshll.u32 1, %s196
          %s202 = ssub.s32 %s201, 1
          loop: start=0, step=1, limit=1
          $region105: #{tpu_custom_call.1} parent=103 // loop_pre_header
            _
          $region106: #{tpu_custom_call.1} parent=103 // loop_header
            %s204 = sphi 0, %s208
            %p205 = scmp.ge.s32.totalorder %s204, 1
            %s209 = sphi %s198, %s198
            %s210 = sphi %s200, %s200
          $region107: #{tpu_custom_call.1} parent=103 // loop_header_branch
            %207 = sbr.rel (%p205) target = $region111
          $region108: #{tpu_custom_call.1} parent=103 // loop_body
            %v211 = vld [vmem:[%s209] sm:%s202]
            %212 = vst [vmem:[%s210] sm:%s202] %v211
          $region109: #{tpu_custom_call.1} parent=103 // loop_footer
            %s208 = sadd.s32 1, %s204
          $region110: #{tpu_custom_call.1} parent=103 // loop_footer_branch
            %203 = sbr.rel target = $region106
          $region111: #{tpu_custom_call.1} parent=103 // loop_exit
            _
        $region104: #{tpu_custom_call.1} parent=88 // pred_fallthru
          _
      $region89: #{tpu_custom_call.1} parent=12 // pred_fallthru
        _
      // Predicated region
      $region90: #{tpu_custom_call.1} parent=12 // pred_check
        %p176 = pneg %p172
      $region91: #{tpu_custom_call.1} parent=12 // pred_check_branch
        %178 = sbr.rel (%p176) target = $region93
      $region92: #{tpu_custom_call.1} parent=12 // pred_region
        %s179 = sshll.u32 1, 1
        %s180 = ssub.s32 %s179, 1
        loop: start=0, step=1, limit=1
        $region94: #{tpu_custom_call.1} parent=92 // loop_pre_header
          _
        $region95: #{tpu_custom_call.1} parent=92 // loop_header
          %s182 = sphi 0, %s186
          %p183 = scmp.ge.s32.totalorder %s182, 1
          %s187 = sphi %s6, %s6
          %s188 = sphi [#allocation7], [#allocation7]
        $region96: #{tpu_custom_call.1} parent=92 // loop_header_branch
          %185 = sbr.rel (%p183) target = $region100
        $region97: #{tpu_custom_call.1} parent=92 // loop_body
          %v189 = vld [vmem:[%s187] sm:%s180]
          %190 = vst [vmem:[%s188] sm:%s180] %v189
        $region98: #{tpu_custom_call.1} parent=92 // loop_footer
          %s186 = sadd.s32 1, %s182
        $region99: #{tpu_custom_call.1} parent=92 // loop_footer_branch
          %181 = sbr.rel target = $region95
        $region100: #{tpu_custom_call.1} parent=92 // loop_exit
          _
      $region93: #{tpu_custom_call.1} parent=12 // pred_fallthru
        _
      // Predicated region
      $region112: #{tpu_custom_call.1} parent=12 // pred_check
        _
      $region113: #{tpu_custom_call.1} parent=12 // pred_check_branch
        %215 = sbr.rel (0) target = $region115
      $region114: #{tpu_custom_call.1} parent=12 // pred_region
        %216 = vsyncadd %s170, 16
      $region115: #{tpu_custom_call.1} parent=12 // pred_fallthru
        _
      %s217 = smul.u32 128, 1
      %s218 = sshll.u32 %s217, 4
      %219 = dma.done [#allocation8], %s218
      %s220 = smul.u32 1, 1
      %s221 = sshll.u32 %s220, 4
      %222 = dma.done %s52, %s221
      %s223 = sshll.u32 %s217, 4
      %224 = dma.done %s99, %s223
      %s225 = sshll.u32 %s220, 4
      %226 = dma.done %s111, %s225
      %s227 = sshll.u32 %s217, 4
      %228 = dma.done %s158, %s227
      %s229 = sshll.u32 %s220, 4
      %230 = dma.done %s170, %s229
    $region13: #{tpu_custom_call.1} parent=1 // pred_fallthru
      _
    %v231 = vld [vmem:[#allocation9] sm:$0xff]
    %v232 = vld [vmem:[#allocation9 + $0x8] sm:$0xff]
    %v233 = vld [vmem:[#allocation2] sm:$0xff]
    %v234 = vld [vmem:[#allocation2 + $0x8] sm:$0xff]
    %v235 = vld [vmem:[#allocation2 + $0x10] sm:$0xff]
    %v236 = vld [vmem:[#allocation2 + $0x18] sm:$0xff]
    %v237 = vld [vmem:[#allocation2 + $0x20] sm:$0xff]
    %v238 = vld [vmem:[#allocation2 + $0x28] sm:$0xff]
    %v239 = vld [vmem:[#allocation2 + $0x30] sm:$0xff]
    %v240 = vld [vmem:[#allocation2 + $0x38] sm:$0xff]
    %v241 = vld [vmem:[#allocation2 + $0x40] sm:$0xff]
    %v242 = vld [vmem:[#allocation2 + $0x48] sm:$0xff]
    %v243 = vld [vmem:[#allocation2 + $0x50] sm:$0xff]
    %v244 = vld [vmem:[#allocation2 + $0x58] sm:$0xff]
    %v245 = vld [vmem:[#allocation2 + $0x60] sm:$0xff]
    %v246 = vld [vmem:[#allocation2 + $0x68] sm:$0xff]
    %v247 = vld [vmem:[#allocation2 + $0x70] sm:$0xff]
    %v248 = vld [vmem:[#allocation2 + $0x78] sm:$0xff]
    %v249 = vld [vmem:[#allocation3] sm:$0x1]
    %v251 = vlaneseq
    %v252 = vshrl.u32 %v251, 7
    %v253 = vsub.s32 0, %v252
    %v254 = vrot.slane %v249, %v253
    %256 = vmatprep.subr.mxu0 0.0
    %257 = vmatpush1.msra.mxu0 %v248
    %258 = vmatprep.subr.mxu0 0.0
    %259 = vmatpush1.msra.mxu0 %v247
    %260 = vmatprep.subr.mxu0 0.0
    %261 = vmatpush1.msra.mxu0 %v246
    %262 = vmatprep.subr.mxu0 0.0
    %263 = vmatpush1.msra.mxu0 %v245
    %264 = vmatprep.subr.mxu0 0.0
    %265 = vmatpush1.msra.mxu0 %v244
    %266 = vmatprep.subr.mxu0 0.0
    %267 = vmatpush1.msra.mxu0 %v243
    %268 = vmatprep.subr.mxu0 0.0
    %269 = vmatpush1.msra.mxu0 %v242
    %270 = vmatprep.subr.mxu0 0.0
    %271 = vmatpush1.msra.mxu0 %v241
    %272 = vmatprep.subr.mxu0 0.0
    %273 = vmatpush1.msra.mxu0 %v240
    %274 = vmatprep.subr.mxu0 0.0
    %275 = vmatpush1.msra.mxu0 %v239
    %276 = vmatprep.subr.mxu0 0.0
    %277 = vmatpush1.msra.mxu0 %v238
    %278 = vmatprep.subr.mxu0 0.0
    %279 = vmatpush1.msra.mxu0 %v237
    %280 = vmatprep.subr.mxu0 0.0
    %281 = vmatpush1.msra.mxu0 %v236
    %282 = vmatprep.subr.mxu0 0.0
    %283 = vmatpush1.msra.mxu0 %v235
    %284 = vmatprep.subr.mxu0 0.0
    %285 = vmatpush1.msra.mxu0 %v234
    %286 = vmatprep.subr.mxu0 0.0
    %287 = vmatpush1.msra.mxu0 %v233
    %288 = vmatprep.subr.mxu0 0.0
    %289 = vmatpush2.msra.mxu0 0.0
    %290 = vmatprep.subr.mxu0 0.0
    %291 = vmatpush2.msra.mxu0 0.0
    %292 = vmatprep.subr.mxu0 0.0
    %293 = vmatpush2.msra.mxu0 0.0
    %294 = vmatprep.subr.mxu0 0.0
    %295 = vmatpush2.msra.mxu0 0.0
    %296 = vmatprep.subr.mxu0 0.0
    %297 = vmatpush2.msra.mxu0 0.0
    %298 = vmatprep.subr.mxu0 0.0
    %299 = vmatpush2.msra.mxu0 0.0
    %300 = vmatprep.subr.mxu0 0.0
    %301 = vmatpush2.msra.mxu0 0.0
    %302 = vmatprep.subr.mxu0 0.0
    %303 = vmatpush2.msra.mxu0 0.0
    %304 = vmatprep.subr.mxu0 0.0
    %305 = vmatpush2.msra.mxu0 0.0
    %306 = vmatprep.subr.mxu0 0.0
    %307 = vmatpush2.msra.mxu0 0.0
    %308 = vmatprep.subr.mxu0 0.0
    %309 = vmatpush2.msra.mxu0 0.0
    %310 = vmatprep.subr.mxu0 0.0
    %311 = vmatpush2.msra.mxu0 0.0
    %312 = vmatprep.subr.mxu0 0.0
    %313 = vmatpush2.msra.mxu0 0.0
    %314 = vmatprep.subr.mxu0 0.0
    %315 = vmatpush2.msra.mxu0 0.0
    %316 = vmatprep.subr.mxu0 0.0
    %317 = vmatpush2.msra.mxu0 0.0
    %318 = vmatprep.subr.mxu0 0.0
    %319 = vmatpush2.msra.mxu0 0.0
    %320 = vmatprep.mubr.f32.mxu0 0.0
    %321 = vmatmul.mubr.f32.gmra.mxu0 %v231
    %v322 = vpop.f32.mrf.mxu0
    %v323 = vadd.f32 %v254, %v322
    %v324 = vpop.f32.mrf.mxu0
    %325 = vmatprep.mubr.f32.mxu0 0.0
    %326 = vmatmul.mubr.f32.gmra.mxu0 %v232
    %v327 = vpop.f32.mrf.mxu0
    %v328 = vadd.f32 %v254, %v327
    %v329 = vpop.f32.mrf.mxu0
    %330 = vdwg.mxu0
    %v331 = vmul.f32 %v323, 0.5
    %v332 = vmul.f32 %v328, 0.5
    %v333 = vmul.f32 %v323, 0.70710677
    %v334 = vmul.f32 %v328, 0.70710677
    %v335 = verf.f32.pop %v333
    %v336 = verf.f32.pop %v334
    %v337 = vadd.f32 %v335, 1.0
    %v338 = vadd.f32 %v336, 1.0
    %v339 = vmul.f32 %v331, %v337
    %v340 = vmul.f32 %v332, %v338
    %v341 = vld [vmem:[#allocation4] sm:$0xff]
    %v342 = vld [vmem:[#allocation4 + $0x8] sm:$0xff]
    %v343 = vld [vmem:[#allocation4 + $0x10] sm:$0xff]
    %v344 = vld [vmem:[#allocation4 + $0x18] sm:$0xff]
    %v345 = vld [vmem:[#allocation4 + $0x20] sm:$0xff]
    %v346 = vld [vmem:[#allocation4 + $0x28] sm:$0xff]
    %v347 = vld [vmem:[#allocation4 + $0x30] sm:$0xff]
    %v348 = vld [vmem:[#allocation4 + $0x38] sm:$0xff]
    %v349 = vld [vmem:[#allocation4 + $0x40] sm:$0xff]
    %v350 = vld [vmem:[#allocation4 + $0x48] sm:$0xff]
    %v351 = vld [vmem:[#allocation4 + $0x50] sm:$0xff]
    %v352 = vld [vmem:[#allocation4 + $0x58] sm:$0xff]
    %v353 = vld [vmem:[#allocation4 + $0x60] sm:$0xff]
    %v354 = vld [vmem:[#allocation4 + $0x68] sm:$0xff]
    %v355 = vld [vmem:[#allocation4 + $0x70] sm:$0xff]
    %v356 = vld [vmem:[#allocation4 + $0x78] sm:$0xff]
    %v357 = vld [vmem:[#allocation5] sm:$0x1]
    %v359 = vlaneseq
    %v360 = vshrl.u32 %v359, 7
    %v361 = vsub.s32 0, %v360
    %v362 = vrot.slane %v357, %v361
    %364 = vmatprep.subr.mxu0 0.0
    %365 = vmatpush1.msra.mxu0 %v356
    %366 = vmatprep.subr.mxu0 0.0
    %367 = vmatpush1.msra.mxu0 %v355
    %368 = vmatprep.subr.mxu0 0.0
    %369 = vmatpush1.msra.mxu0 %v354
    %370 = vmatprep.subr.mxu0 0.0
    %371 = vmatpush1.msra.mxu0 %v353
    %372 = vmatprep.subr.mxu0 0.0
    %373 = vmatpush1.msra.mxu0 %v352
    %374 = vmatprep.subr.mxu0 0.0
    %375 = vmatpush1.msra.mxu0 %v351
    %376 = vmatprep.subr.mxu0 0.0
    %377 = vmatpush1.msra.mxu0 %v350
    %378 = vmatprep.subr.mxu0 0.0
    %379 = vmatpush1.msra.mxu0 %v349
    %380 = vmatprep.subr.mxu0 0.0
    %381 = vmatpush1.msra.mxu0 %v348
    %382 = vmatprep.subr.mxu0 0.0
    %383 = vmatpush1.msra.mxu0 %v347
    %384 = vmatprep.subr.mxu0 0.0
    %385 = vmatpush1.msra.mxu0 %v346
    %386 = vmatprep.subr.mxu0 0.0
    %387 = vmatpush1.msra.mxu0 %v345
    %388 = vmatprep.subr.mxu0 0.0
    %389 = vmatpush1.msra.mxu0 %v344
    %390 = vmatprep.subr.mxu0 0.0
    %391 = vmatpush1.msra.mxu0 %v343
    %392 = vmatprep.subr.mxu0 0.0
    %393 = vmatpush1.msra.mxu0 %v342
    %394 = vmatprep.subr.mxu0 0.0
    %395 = vmatpush1.msra.mxu0 %v341
    %396 = vmatprep.subr.mxu0 0.0
    %397 = vmatpush2.msra.mxu0 0.0
    %398 = vmatprep.subr.mxu0 0.0
    %399 = vmatpush2.msra.mxu0 0.0
    %400 = vmatprep.subr.mxu0 0.0
    %401 = vmatpush2.msra.mxu0 0.0
    %402 = vmatprep.subr.mxu0 0.0
    %403 = vmatpush2.msra.mxu0 0.0
    %404 = vmatprep.subr.mxu0 0.0
    %405 = vmatpush2.msra.mxu0 0.0
    %406 = vmatprep.subr.mxu0 0.0
    %407 = vmatpush2.msra.mxu0 0.0
    %408 = vmatprep.subr.mxu0 0.0
    %409 = vmatpush2.msra.mxu0 0.0
    %410 = vmatprep.subr.mxu0 0.0
    %411 = vmatpush2.msra.mxu0 0.0
    %412 = vmatprep.subr.mxu0 0.0
    %413 = vmatpush2.msra.mxu0 0.0
    %414 = vmatprep.subr.mxu0 0.0
    %415 = vmatpush2.msra.mxu0 0.0
    %416 = vmatprep.subr.mxu0 0.0
    %417 = vmatpush2.msra.mxu0 0.0
    %418 = vmatprep.subr.mxu0 0.0
    %419 = vmatpush2.msra.mxu0 0.0
    %420 = vmatprep.subr.mxu0 0.0
    %421 = vmatpush2.msra.mxu0 0.0
    %422 = vmatprep.subr.mxu0 0.0
    %423 = vmatpush2.msra.mxu0 0.0
    %424 = vmatprep.subr.mxu0 0.0
    %425 = vmatpush2.msra.mxu0 0.0
    %426 = vmatprep.subr.mxu0 0.0
    %427 = vmatpush2.msra.mxu0 0.0
    %428 = vmatprep.mubr.f32.mxu0 0.0
    %429 = vmatmul.mubr.f32.gmra.mxu0 %v339
    %v430 = vpop.f32.mrf.mxu0
    %v431 = vadd.f32 %v362, %v430
    %v432 = vpop.f32.mrf.mxu0
    %433 = vmatprep.mubr.f32.mxu0 0.0
    %434 = vmatmul.mubr.f32.gmra.mxu0 %v340
    %v435 = vpop.f32.mrf.mxu0
    %v436 = vadd.f32 %v362, %v435
    %v437 = vpop.f32.mrf.mxu0
    %438 = vdwg.mxu0
    %v439 = vmul.f32 %v431, 0.5
    %v440 = vmul.f32 %v436, 0.5
    %v441 = vmul.f32 %v431, 0.70710677
    %v442 = vmul.f32 %v436, 0.70710677
    %v443 = verf.f32.pop %v441
    %v444 = verf.f32.pop %v442
    %v445 = vadd.f32 %v443, 1.0
    %v446 = vadd.f32 %v444, 1.0
    %v447 = vmul.f32 %v439, %v445
    %v448 = vmul.f32 %v440, %v446
    %v449 = vld [vmem:[#allocation6] sm:$0xff]
    %v450 = vld [vmem:[#allocation6 + $0x8] sm:$0xff]
    %v451 = vld [vmem:[#allocation6 + $0x10] sm:$0xff]
    %v452 = vld [vmem:[#allocation6 + $0x18] sm:$0xff]
    %v453 = vld [vmem:[#allocation6 + $0x20] sm:$0xff]
    %v454 = vld [vmem:[#allocation6 + $0x28] sm:$0xff]
    %v455 = vld [vmem:[#allocation6 + $0x30] sm:$0xff]
    %v456 = vld [vmem:[#allocation6 + $0x38] sm:$0xff]
    %v457 = vld [vmem:[#allocation6 + $0x40] sm:$0xff]
    %v458 = vld [vmem:[#allocation6 + $0x48] sm:$0xff]
    %v459 = vld [vmem:[#allocation6 + $0x50] sm:$0xff]
    %v460 = vld [vmem:[#allocation6 + $0x58] sm:$0xff]
    %v461 = vld [vmem:[#allocation6 + $0x60] sm:$0xff]
    %v462 = vld [vmem:[#allocation6 + $0x68] sm:$0xff]
    %v463 = vld [vmem:[#allocation6 + $0x70] sm:$0xff]
    %v464 = vld [vmem:[#allocation6 + $0x78] sm:$0xff]
    %v465 = vld [vmem:[#allocation7] sm:$0x1]
    %v467 = vlaneseq
    %v468 = vshrl.u32 %v467, 7
    %v469 = vsub.s32 0, %v468
    %v470 = vrot.slane %v465, %v469
    %472 = vmatprep.subr.mxu0 0.0
    %473 = vmatpush1.msra.mxu0 %v464
    %474 = vmatprep.subr.mxu0 0.0
    %475 = vmatpush1.msra.mxu0 %v463
    %476 = vmatprep.subr.mxu0 0.0
    %477 = vmatpush1.msra.mxu0 %v462
    %478 = vmatprep.subr.mxu0 0.0
    %479 = vmatpush1.msra.mxu0 %v461
    %480 = vmatprep.subr.mxu0 0.0
    %481 = vmatpush1.msra.mxu0 %v460
    %482 = vmatprep.subr.mxu0 0.0
    %483 = vmatpush1.msra.mxu0 %v459
    %484 = vmatprep.subr.mxu0 0.0
    %485 = vmatpush1.msra.mxu0 %v458
    %486 = vmatprep.subr.mxu0 0.0
    %487 = vmatpush1.msra.mxu0 %v457
    %488 = vmatprep.subr.mxu0 0.0
    %489 = vmatpush1.msra.mxu0 %v456
    %490 = vmatprep.subr.mxu0 0.0
    %491 = vmatpush1.msra.mxu0 %v455
    %492 = vmatprep.subr.mxu0 0.0
    %493 = vmatpush1.msra.mxu0 %v454
    %494 = vmatprep.subr.mxu0 0.0
    %495 = vmatpush1.msra.mxu0 %v453
    %496 = vmatprep.subr.mxu0 0.0
    %497 = vmatpush1.msra.mxu0 %v452
    %498 = vmatprep.subr.mxu0 0.0
    %499 = vmatpush1.msra.mxu0 %v451
    %500 = vmatprep.subr.mxu0 0.0
    %501 = vmatpush1.msra.mxu0 %v450
    %502 = vmatprep.subr.mxu0 0.0
    %503 = vmatpush1.msra.mxu0 %v449
    %504 = vmatprep.subr.mxu0 0.0
    %505 = vmatpush2.msra.mxu0 0.0
    %506 = vmatprep.subr.mxu0 0.0
    %507 = vmatpush2.msra.mxu0 0.0
    %508 = vmatprep.subr.mxu0 0.0
    %509 = vmatpush2.msra.mxu0 0.0
    %510 = vmatprep.subr.mxu0 0.0
    %511 = vmatpush2.msra.mxu0 0.0
    %512 = vmatprep.subr.mxu0 0.0
    %513 = vmatpush2.msra.mxu0 0.0
    %514 = vmatprep.subr.mxu0 0.0
    %515 = vmatpush2.msra.mxu0 0.0
    %516 = vmatprep.subr.mxu0 0.0
    %517 = vmatpush2.msra.mxu0 0.0
    %518 = vmatprep.subr.mxu0 0.0
    %519 = vmatpush2.msra.mxu0 0.0
    %520 = vmatprep.subr.mxu0 0.0
    %521 = vmatpush2.msra.mxu0 0.0
    %522 = vmatprep.subr.mxu0 0.0
    %523 = vmatpush2.msra.mxu0 0.0
    %524 = vmatprep.subr.mxu0 0.0
    %525 = vmatpush2.msra.mxu0 0.0
    %526 = vmatprep.subr.mxu0 0.0
    %527 = vmatpush2.msra.mxu0 0.0
    %528 = vmatprep.subr.mxu0 0.0
    %529 = vmatpush2.msra.mxu0 0.0
    %530 = vmatprep.subr.mxu0 0.0
    %531 = vmatpush2.msra.mxu0 0.0
    %532 = vmatprep.subr.mxu0 0.0
    %533 = vmatpush2.msra.mxu0 0.0
    %534 = vmatprep.subr.mxu0 0.0
    %535 = vmatpush2.msra.mxu0 0.0
    %536 = vmatprep.mubr.f32.mxu0 0.0
    %537 = vmatmul.mubr.f32.gmra.mxu0 %v447
    %v538 = vpop.f32.mrf.mxu0
    %v539 = vadd.f32 %v470, %v538
    %v540 = vpop.f32.mrf.mxu0
    %541 = vmatprep.mubr.f32.mxu0 0.0
    %542 = vmatmul.mubr.f32.gmra.mxu0 %v448
    %v543 = vpop.f32.mrf.mxu0
    %v544 = vadd.f32 %v470, %v543
    %v545 = vpop.f32.mrf.mxu0
    %546 = vdwg.mxu0
    %547 = vst [vmem:[#allocation12] sm:$0xff] %v539
    %548 = vst [vmem:[#allocation12 + $0x8] sm:$0xff] %v544
    // Predicated region
    $region116: #{tpu_custom_call.1} parent=1 // pred_check
      _
    $region117: #{tpu_custom_call.1} parent=1 // pred_check_branch
      %550 = sbr.rel (0) target = $region119
    $region118: #{tpu_custom_call.1} parent=1 // pred_region
      %s551 = sadd.s32 0, 0
      %s552 = smul.u32 2, %s551
      %s554 = ssub.s32 256, 256
      %555 = vsyncadd [#allocation11], %s554
      %s556 = smul.addr %s552, 128
      %s557 = scalar_lea.hbm %s7, %s556
      %s558 = sshll.u32 [#allocation12], 4
      %s559 = int_to_ptr.vmem [resolvable:$true] %s558
      %564 = dma.vmem_to_hbm [thread:$0]  %s559, 256, %s557, [#allocation11], 128, 128, 8
    $region119: #{tpu_custom_call.1} parent=1 // pred_fallthru
      _
    // Predicated region
    $region120: #{tpu_custom_call.1} parent=1 // pred_check
      _
    $region121: #{tpu_custom_call.1} parent=1 // pred_check_branch
      %566 = sbr.rel (0) target = $region123
    $region122: #{tpu_custom_call.1} parent=1 // pred_region
      %567 = dma.done [#allocation11], 256
    $region123: #{tpu_custom_call.1} parent=1 // pred_fallthru
      _
    %568 = vsyncpa [#allocation10], 1
    %569 = vsyncpa [#allocation11], 1
  %570 = vsyncmov [#allocation8]
  %s571 = vpop.sfrf %570
  %p572 = scmp.eq.s32.totalorder %s571, 0
  %p573 = pneg %p572
  %575 = shalt.err (%p573)
  %s576 = scalar_lea.sflag [#allocation8], 1
  %577 = vsyncmov %s576
  %s578 = vpop.sfrf %577
  %p579 = scmp.eq.s32.totalorder %s578, 0
  %p580 = pneg %p579
  %582 = shalt.err (%p580)
  %s583 = scalar_lea.sflag [#allocation8], 2
  %584 = vsyncmov %s583
  %s585 = vpop.sfrf %584
  %p586 = scmp.eq.s32.totalorder %s585, 0
  %p587 = pneg %p586
  %589 = shalt.err (%p587)
  %s590 = scalar_lea.sflag [#allocation8], 3
  %591 = vsyncmov %s590
  %s592 = vpop.sfrf %591
  %p593 = scmp.eq.s32.totalorder %s592, 0
  %p594 = pneg %p593
  %596 = shalt.err (%p594)
  %s597 = scalar_lea.sflag [#allocation8], 4
  %598 = vsyncmov %s597
  %s599 = vpop.sfrf %598
  %p600 = scmp.eq.s32.totalorder %s599, 0
  %p601 = pneg %p600
  %603 = shalt.err (%p601)
  %s604 = scalar_lea.sflag [#allocation8], 5
  %605 = vsyncmov %s604
  %s606 = vpop.sfrf %605
  %p607 = scmp.eq.s32.totalorder %s606, 0
  %p608 = pneg %p607
  %610 = shalt.err (%p608)

</llo_original>
